<compile_context>
chip_gen: v5e
topology: v5e:2x2
jax: 0.10.0
libtpu: 0.0.40
codegen_flags: <defaults>
</compile_context>

<pallas_src>
import functools

import jax
import jax.numpy as jnp
from jax.experimental import pallas as pl
from jax.experimental.pallas import tpu as pltpu


# ---------------------------------------------------------------------------
# Kernels
# ---------------------------------------------------------------------------
def _simam_fused_kernel(x_ref, o_ref, *, inv_hw, c0, c1):
    """Full spatial plane per block row: block = (tile_bc, HW).

    Reduction over the lane axis; shifted two-pass variance (matches the
    PyTorch sum((x - mu)^2) and avoids catastrophic cancellation).
    c0 = 4 / (HW - 1), c1 = 4 * e_lambda.
    """
    x = x_ref[...].astype(jnp.float32)
    mu = jnp.sum(x, axis=-1, keepdims=True) * inv_hw
    d = x - mu
    d2 = d * d
    s = jnp.sum(d2, axis=-1, keepdims=True)
    denom = s * c0 + c1                         # (tile_bc, 1), strictly > 0
    r = pl.reciprocal(denom, approx=True)       # EUP slot
    inv = r * (2.0 - denom * r)                 # one Newton step -> ~f32 accuracy
    y = d2 * inv + 0.5
    o_ref[...] = x_ref[...] * jax.nn.sigmoid(y).astype(o_ref.dtype)


def _simam_split_kernel(x_ref, o_ref, sum_ref, sq_ref, *,
                        hw_tiles, tile_hw, hw, inv_hw, c0, c1, mask_tail):
    """Huge-HW fallback: grid axis 1 has 2*hw_tiles steps.

    Phase 0 (k <  hw_tiles): accumulate per-row sum and sum-of-squares.
    Phase 1 (k >= hw_tiles): revisit the same x blocks and write the output.
    The output BlockSpec pins block (i, 0) resident through phase 0, so it is
    only written back once it holds real data.
    """
    k = pl.program_id(1)

    @pl.when(k == 0)
    def _():
        sum_ref[...] = jnp.zeros_like(sum_ref)
        sq_ref[...] = jnp.zeros_like(sq_ref)

    x = x_ref[...].astype(jnp.float32)

    @pl.when(k < hw_tiles)
    def _():
        if mask_tail:
            col = jax.lax.broadcasted_iota(jnp.int32, x.shape, 1) + k * tile_hw
            xm = jnp.where(col < hw, x, 0.0)
        else:
            xm = x
        sum_ref[...] += jnp.sum(xm, axis=-1, keepdims=True)
        sq_ref[...] += jnp.sum(xm * xm, axis=-1, keepdims=True)

    @pl.when(k >= hw_tiles)
    def _():
        # NOTE: one-pass variance (sum_x2 - mu*sum_x) can lose precision when
        # |mean|^2 >> variance; acceptable for this rare huge-HW path.
        mu = sum_ref[...] * inv_hw
        s = sq_ref[...] - mu * sum_ref[...]
        denom = s * c0 + c1
        r = pl.reciprocal(denom, approx=True)
        inv = r * (2.0 - denom * r)
        d = x - mu
        y = d * d * inv + 0.5
        o_ref[...] = x_ref[...] * jax.nn.sigmoid(y).astype(o_ref.dtype)


# ---------------------------------------------------------------------------
# Wrapper helpers
# ---------------------------------------------------------------------------
_SLACK_BYTES = 2 << 20


def _round_up(v, m):
    return ((v + m - 1) // m) * m


def _round_down(v, m):
    return (v // m) * m


def _vmem_capacity_bytes():
    try:
        info = pltpu.get_tpu_info()
        cap = getattr(info, "vmem_capacity_bytes", None)
        if cap:
            return int(cap)
    except Exception:
        pass
    return 64 << 20   # v7x per-TC VMEM; conservative for v5e/v6e (128 MiB)


def _vmem_limit(block_bytes):
    # in + out, double-buffered, plus slack. Only raise the scoped limit when
    # the most conservative default (16 MiB on v5e) would not fit; never set
    # it below the actual pipeline requirement.
    needed = 4 * block_bytes + _SLACK_BYTES
    return int(needed) if needed > (16 << 20) else None


def _choose_bc_tile(bc, bytes_per_row, budget, align):
    tile = max(align, _round_down(budget // max(bytes_per_row, 1), align))
    tile = min(tile, bc)
    # Keep >= 2 grid steps when possible so both v7x TensorCores get work.
    if tile >= bc and bc > align:
        tile = min(tile, _round_up((bc + 1) // 2, align))
    if tile < bc:
        tile = max(align, _round_down(tile, align))
    return max(1, min(tile, bc))


# ---------------------------------------------------------------------------
# Public entry point
# ---------------------------------------------------------------------------
def simam(x, e_lambda=1e-4, *, block_budget_bytes=None):
    """SimAM forward. x: (B, C, H, W) -> (B, C, H, W). Matches PyTorch module."""
    b, c, h, w = x.shape
    hw = h * w
    bc = b * c
    n = float(hw - 1)
    inv_hw = 1.0 / float(hw)
    c0 = 4.0 / n
    c1 = 4.0 * float(e_lambda)
    itemsize = jnp.dtype(x.dtype).itemsize
    align = max(8, 32 // itemsize)            # sublane packing: f32 8, bf16 16, int8 32

    if block_budget_bytes is None:
        cap = _vmem_capacity_bytes()
        # <= ~50% of VMEM for 4 double-buffered blocks + slack; ~4 MiB target.
        block_budget_bytes = min(4 << 20, max(64 << 10, (cap // 2 - _SLACK_BYTES) // 4))

    x2d = x.reshape(bc, hw)                   # lane axis = HW; no wrapper transposes

    if align * hw * itemsize <= block_budget_bytes:
        # ---- fused single-pass path: block = (tile_bc, HW) ------------------
        tile_bc = _choose_bc_tile(bc, hw * itemsize, block_budget_bytes, align)
        grid = (pl.cdiv(bc, tile_bc),)
        kernel = functools.partial(_simam_fused_kernel, inv_hw=inv_hw, c0=c0, c1=c1)
        out2d = pl.pallas_call(
            kernel,
            out_shape=jax.ShapeDtypeStruct(x2d.shape, x2d.dtype),
            grid_spec=pltpu.PrefetchScalarGridSpec(
                num_scalar_prefetch=0,
                grid=grid,
                in_specs=[pl.BlockSpec((tile_bc, hw), lambda i: (i, 0))],
                out_specs=pl.BlockSpec((tile_bc, hw), lambda i: (i, 0)),
            ),
            compiler_params=pltpu.CompilerParams(
                dimension_semantics=("parallel",),
                vmem_limit_bytes=_vmem_limit(tile_bc * hw * itemsize),
            ),
        )(x2d)
    else:
        # ---- huge-HW path: tile HW with a two-phase (reduce, apply) grid ----
        tile_hw = max(128, _round_down(block_budget_bytes // (align * itemsize), 128))
        tile_hw = min(tile_hw, _round_up(hw, 128))
        hw_tiles = pl.cdiv(hw, tile_hw)
        tile_bc = _choose_bc_tile(bc, tile_hw * itemsize, block_budget_bytes, align)
        grid = (pl.cdiv(bc, tile_bc), 2 * hw_tiles)
        mask_tail = (hw % tile_hw) != 0
        kernel = functools.partial(
            _simam_split_kernel, hw_tiles=hw_tiles, tile_hw=tile_hw, hw=hw,
            inv_hw=inv_hw, c0=c0, c1=c1, mask_tail=mask_tail)

        def x_map(i, k):
            return (i, jnp.where(k < hw_tiles, k, k - hw_tiles))

        def o_map(i, k):
            return (i, jnp.where(k < hw_tiles, 0, k - hw_tiles))

        out2d = pl.pallas_call(
            kernel,
            out_shape=jax.ShapeDtypeStruct(x2d.shape, x2d.dtype),
            grid_spec=pltpu.PrefetchScalarGridSpec(
                num_scalar_prefetch=0,
                grid=grid,
                in_specs=[pl.BlockSpec((tile_bc, tile_hw), x_map)],
                out_specs=pl.BlockSpec((tile_bc, tile_hw), o_map),
                scratch_shapes=[pltpu.VMEM((tile_bc, 1), jnp.float32),
                                pltpu.VMEM((tile_bc, 1), jnp.float32)],
            ),
            compiler_params=pltpu.CompilerParams(
                dimension_semantics=("parallel", "arbitrary"),
                vmem_limit_bytes=_vmem_limit(tile_bc * tile_hw * itemsize),
            ),
        )(x2d)

    return out2d.reshape(b, c, h, w)


def simam_ref(x, e_lambda=1e-4):
    """Pure-JAX reference matching the PyTorch forward."""
    b, c, h, w = x.shape
    n = w * h - 1
    mu = jnp.mean(x, axis=(2, 3), keepdims=True)
    d = (x - mu) ** 2
    s = jnp.sum(d, axis=(2, 3), keepdims=True)
    y = d / (4.0 * (s / n + e_lambda)) + 0.5
    return x * jax.nn.sigmoid(y)


if __name__ == "__main__":
    key = jax.random.PRNGKey(0)
    k1, k2, k3 = jax.random.split(key, 3)

    # 1) Main shape: lane-dense fused path (H*W = 256).
    x1 = jax.random.normal(k1, (2, 4, 16, 16), dtype=jnp.float32)
    o1 = jax.block_until_ready(simam(x1))
    r1 = simam_ref(x1)
    assert o1.shape == x1.shape
    assert jnp.allclose(o1, r1, atol=1e-5, rtol=1e-5), "mismatch (fused, 16x16)"

    # 2) Small / ragged spatial map (7x7) — same row layout, masked lane tail,
    #    no wrapper transposes.
    x2 = jax.random.normal(k2, (2, 32, 7, 7), dtype=jnp.float32)
    o2 = jax.block_until_ready(simam(x2))
    assert jnp.allclose(o2, simam_ref(x2), atol=1e-5, rtol=1e-5), "mismatch (fused, 7x7)"

    # 3) Force the tiled-HW two-phase path with a tiny block budget
    #    (exercises HW accumulation, tail masking, and output revisit logic).
    x3 = jax.random.normal(k3, (2, 8, 30, 30), dtype=jnp.float32)
    o3 = jax.block_until_ready(simam(x3, block_budget_bytes=16 * 1024))
    assert jnp.allclose(o3, simam_ref(x3), atol=1e-5, rtol=1e-5), "mismatch (split, 30x30)"

    print("KERNEL_OK")
</pallas_src>

<mosaic_0001>
module attributes {stable_mosaic.version = 11 : i64} {
  func.func @_simam_fused_kernel(%arg0: i32, %arg1: memref<8x256xf32, #tpu.memory_space<vmem>>, %arg2: memref<8x256xf32, #tpu.memory_space<vmem>>) attributes {dimension_semantics = [#tpu.dimension_semantics<parallel>], iteration_bounds = array<i64: 1>, scalar_prefetch = 0 : i64, scratch_operands = 0 : i64, tpu.core_type = #tpu.core_type<tc>, window_params = [{transform_indices = @transform_0, window_bounds = array<i64: 8, 256>}, {transform_indices = @transform_1, window_bounds = array<i64: 8, 256>}]} {
    %c0 = arith.constant 0 : index
    %c0_0 = arith.constant 0 : index
    %0 = vector.load %arg1[%c0, %c0_0] : memref<8x256xf32, #tpu.memory_space<vmem>>, vector<8x256xf32>
    %cst = arith.constant dense<0.000000e+00> : vector<8xf32>
    %1 = vector.multi_reduction <add>, %0, %cst [1] : vector<8x256xf32> to vector<8xf32>
    %2 = vector.shape_cast %1 : vector<8xf32> to vector<8x1xf32>
    %cst_1 = arith.constant 3.906250e-03 : f32
    %3 = vector.broadcast %cst_1 : f32 to vector<8x1xf32>
    %4 = arith.mulf %2, %3 : vector<8x1xf32>
    %5 = vector.broadcast %4 : vector<8x1xf32> to vector<8x256xf32>
    %6 = arith.subf %0, %5 : vector<8x256xf32>
    %7 = arith.mulf %6, %6 : vector<8x256xf32>
    %cst_2 = arith.constant dense<0.000000e+00> : vector<8xf32>
    %8 = vector.multi_reduction <add>, %7, %cst_2 [1] : vector<8x256xf32> to vector<8xf32>
    %9 = vector.shape_cast %8 : vector<8xf32> to vector<8x1xf32>
    %cst_3 = arith.constant 0.0156862754 : f32
    %10 = vector.broadcast %cst_3 : f32 to vector<8x1xf32>
    %11 = arith.mulf %9, %10 : vector<8x1xf32>
    %cst_4 = arith.constant 4.000000e-04 : f32
    %12 = vector.broadcast %cst_4 : f32 to vector<8x1xf32>
    %13 = arith.addf %11, %12 : vector<8x1xf32>
    %14 = tpu.reciprocal %13 {approx = true} : vector<8x1xf32> -> vector<8x1xf32>
    %15 = arith.mulf %13, %14 : vector<8x1xf32>
    %cst_5 = arith.constant 2.000000e+00 : f32
    %16 = vector.broadcast %cst_5 : f32 to vector<8x1xf32>
    %17 = arith.subf %16, %15 : vector<8x1xf32>
    %18 = arith.mulf %14, %17 : vector<8x1xf32>
    %19 = vector.broadcast %18 : vector<8x1xf32> to vector<8x256xf32>
    %20 = arith.mulf %7, %19 : vector<8x256xf32>
    %cst_6 = arith.constant 5.000000e-01 : f32
    %21 = vector.broadcast %cst_6 : f32 to vector<8x256xf32>
    %22 = arith.addf %20, %21 : vector<8x256xf32>
    %c0_7 = arith.constant 0 : index
    %c0_8 = arith.constant 0 : index
    %23 = vector.load %arg1[%c0_7, %c0_8] : memref<8x256xf32, #tpu.memory_space<vmem>>, vector<8x256xf32>
    %24 = arith.negf %22 : vector<8x256xf32>
    %25 = math.exp %24 : vector<8x256xf32>
    %cst_9 = arith.constant 1.000000e+00 : f32
    %26 = vector.broadcast %cst_9 : f32 to vector<8x256xf32>
    %27 = arith.addf %26, %25 : vector<8x256xf32>
    %28 = arith.divf %26, %27 : vector<8x256xf32>
    %29 = arith.mulf %23, %28 : vector<8x256xf32>
    %c0_10 = arith.constant 0 : index
    %c0_11 = arith.constant 0 : index
    %30 = vector.load %arg2[%c0_10, %c0_11] : memref<8x256xf32, #tpu.memory_space<vmem>>, vector<8x256xf32>
    tpu.vector_store %arg2[%c0_10, %c0_11], %29 {strides = array<i32>} : memref<8x256xf32, #tpu.memory_space<vmem>>, vector<8x256xf32>,
    return
  }
  func.func @transform_0(%arg0: i32) -> (i32, i32) {
    %c0_i32 = arith.constant 0 : i32
    %c0_i32_0 = arith.constant 0 : i32
    return %arg0, %c0_i32 : i32, i32
  }
  func.func @transform_1(%arg0: i32) -> (i32, i32) {
    %c0_i32 = arith.constant 0 : i32
    %c0_i32_0 = arith.constant 0 : i32
    return %arg0, %c0_i32 : i32, i32
  }
}

</mosaic_0001>

<llo_original>
// kernel: tpu_custom_call.1
$region0: #{tpu_custom_call.1}
  #allocation0 [shape = 'u32[]', space=smem, size = 0x4, offset = 0x4, fixed_abs, tag = 'smem constant byte address 0x4 - core index']
  #allocation1 [shape = 'u32[72,128]{1,0:T(1,128)}', space=vmem, size = 0x9000, scoped, tag = 'internal scratch']
  %s0 = inlined_call_operand.hbm [shape: f32[8,256], index: 0, kind: input, shape index: {}]
  %s1 = inlined_call_operand.hbm [shape: f32[8,256], index: 1, kind: output, shape index: {}]
  %s2 = sld [smem:[#allocation0]]
  $region18: #{tpu_custom_call.1} parent=0
    _
  %s4 = ssub.s32 1, %s2
  %s5 = scalar_select 0, %s4, %s2
  $region1: #{tpu_custom_call.1} parent=0
    #allocation2 [shape = 'u8[8192]{0}', space=vmem, size = 0x2000, scoped, tag = 'input window, operand 0, single buffered']
    #allocation3 [shape = 's32[1]{0}', space=sflag, size = 0x4, scoped, tag = 'scoped memory for tpu_custom_call.1']
    #allocation4 [shape = 's32[1]{0}', space=sflag, size = 0x4, scoped, tag = 'scoped memory for tpu_custom_call.1']
    #allocation5 [shape = 'u8[8192]{0}', space=vmem, size = 0x2000, scoped, tag = 'output window, operand 0, single buffered']
    %6 = vsyncpa [#allocation3], 0
    %7 = vsyncpa [#allocation4], 0
    // Predicated region
    $region2: #{tpu_custom_call.1} parent=1 // pred_check
      _
    $region3: #{tpu_custom_call.1} parent=1 // pred_check_branch
      %9 = sbr.rel (0) target = $region5
    $region4: #{tpu_custom_call.1} parent=1 // pred_region
      %11 = vsyncadd [#allocation3], 0
      %s13 = sshll.u32 %s0, 4
      %s14 = int_to_ptr.hbm [resolvable:$true] %s13
      %s15 = sshll.u32 [#allocation2], 4
      %s16 = int_to_ptr.vmem [resolvable:$true] %s15
      %18 = dma.hbm_to_vmem [thread:$0]  %s14, 256, %s16, [#allocation3]
    $region5: #{tpu_custom_call.1} parent=1 // pred_fallthru
      _
    // Predicated region
    $region6: #{tpu_custom_call.1} parent=1 // pred_check
      _
    $region7: #{tpu_custom_call.1} parent=1 // pred_check_branch
      %20 = sbr.rel (0) target = $region9
    $region8: #{tpu_custom_call.1} parent=1 // pred_region
      %22 = dma.done [#allocation3], 256
    $region9: #{tpu_custom_call.1} parent=1 // pred_fallthru
      _
    %v23 = vld [vmem:[#allocation2] sm:$0xff]
    %v24 = vld [vmem:[#allocation2 + $0x8] sm:$0xff]
    %v25 = vadd.f32 %v23, %v24
    %26 = vadd.xlane.f32.xlu0 %v25
    %v27 = vpop.xlane.xlu0 %26
    %v28 = vmul.f32 %v27, 0.00390625
    %v29 = vsub.f32 %v23, %v28
    %v30 = vsub.f32 %v24, %v28
    %v31 = vmul.f32 %v29, %v29
    %v32 = vmul.f32 %v30, %v30
    %v33 = vadd.f32 %v31, %v32
    %34 = vadd.xlane.f32.xlu0 %v33
    %v35 = vpop.xlane.xlu0 %34
    %v36 = vmul.f32 %v35, 0.015686275
    %v37 = vadd.f32 %v36, 0.0004
    %v38 = vrcp.pop %v37
    %v39 = vmul.f32 %v37, %v38
    %v40 = vsub.f32 2.0, %v39
    %v41 = vmul.f32 %v38, %v40
    %v42 = vmul.f32 %v31, %v41
    %v43 = vmul.f32 %v32, %v41
    %v44 = vadd.f32 %v42, 0.5
    %v45 = vadd.f32 %v43, 0.5
    %v46 = vxor.u32 %v44, 2147483648
    %v47 = vxor.u32 %v45, 2147483648
    %v48 = vmul.f32 %v46, 1.442695
    %v49 = vpow.pop %v48
    %v50 = vmul.f32 %v47, 1.442695
    %v51 = vpow.pop %v50
    %v52 = vadd.f32 %v49, 1.0
    %v53 = vadd.f32 %v51, 1.0
    %v54 = vrcp.pop %v52
    %v55 = vmul.f32 %v52, %v54
    %v56 = vsub.f32 1.0, %v55
    %v57 = vmul.f32 %v54, %v56
    %v58 = vadd.f32 %v54, %v57
    %vm59 = vweird.f32 %v52
    %vm60 = vweird.f32 %v54
    %vm61 = vmor %vm59, %vm60
    %v62 = vsel %vm61, %v54, %v58
    %v63 = vand.u32 2147483647, %v52
    %vm64 = vcmp.eq.f32.partialorder %v63, 8.507059e+37
    %v65 = vand.u32 %v52, 2147483648
    %v66 = vor.u32 1.1754944e-38, %v65
    %v67 = vsel %vm64, %v66, %v62
    %v68 = vmul.f32 1.0, %v67
    %v69 = vrcp.pop %v53
    %v70 = vmul.f32 %v53, %v69
    %v71 = vsub.f32 1.0, %v70
    %v72 = vmul.f32 %v69, %v71
    %v73 = vadd.f32 %v69, %v72
    %vm74 = vweird.f32 %v53
    %vm75 = vweird.f32 %v69
    %vm76 = vmor %vm74, %vm75
    %v77 = vsel %vm76, %v69, %v73
    %v78 = vand.u32 2147483647, %v53
    %vm79 = vcmp.eq.f32.partialorder %v78, 8.507059e+37
    %v80 = vand.u32 %v53, 2147483648
    %v81 = vor.u32 1.1754944e-38, %v80
    %v82 = vsel %vm79, %v81, %v77
    %v83 = vmul.f32 1.0, %v82
    %v84 = vmul.f32 %v23, %v68
    %v85 = vmul.f32 %v24, %v83
    %86 = vst [vmem:[#allocation5] sm:$0xff] %v84
    %87 = vst [vmem:[#allocation5 + $0x8] sm:$0xff] %v85
    // Predicated region
    $region10: #{tpu_custom_call.1} parent=1 // pred_check
      _
    $region11: #{tpu_custom_call.1} parent=1 // pred_check_branch
      %89 = sbr.rel (0) target = $region13
    $region12: #{tpu_custom_call.1} parent=1 // pred_region
      %91 = vsyncadd [#allocation4], 0
      %s93 = sshll.u32 [#allocation5], 4
      %s94 = int_to_ptr.vmem [resolvable:$true] %s93
      %s95 = sshll.u32 %s1, 4
      %s96 = int_to_ptr.hbm [resolvable:$true] %s95
      %98 = dma.vmem_to_hbm [thread:$0]  %s94, 256, %s96, [#allocation4]
    $region13: #{tpu_custom_call.1} parent=1 // pred_fallthru
      _
    // Predicated region
    $region14: #{tpu_custom_call.1} parent=1 // pred_check
      _
    $region15: #{tpu_custom_call.1} parent=1 // pred_check_branch
      %100 = sbr.rel (0) target = $region17
    $region16: #{tpu_custom_call.1} parent=1 // pred_region
      %102 = dma.done [#allocation4], 256
    $region17: #{tpu_custom_call.1} parent=1 // pred_fallthru
      _
    %103 = vsyncpa [#allocation3], 1
    %104 = vsyncpa [#allocation4], 1

</llo_original>
